<compile_context>
chip_gen: v6e
topology: v6e:2x2x1
jax: 0.10.0
libtpu: 0.0.40
codegen_flags: <defaults>
</compile_context>

<pallas_src>
import jax
import jax.numpy as jnp
from jax.experimental import pallas as pl
from jax.experimental.pallas import tpu as pltpu


def _upsample_kernel(m_ref, x_ref, o_ref):
    # m_ref: (W, s*s*W) one-hot selection matrix (exact 0/1 weights)
    # x_ref: (Rb, W)      block of input rows
    # o_ref: (Rb, s*s*W)  block of output rows
    o_ref[...] = jnp.dot(
        x_ref[...], m_ref[...], preferred_element_type=jnp.float32
    ).astype(o_ref.dtype)


def _choose_block_rows(total_rows, out_cols, itemsize):
    """Rows per grid step.

    Targets ~2 MiB output blocks (amortizes the ~0.35us per-step overhead and keeps
    HBM DMAs large and contiguous) while keeping double-buffered in+out blocks far
    below the 32 MiB vmem_limit we request (safe on v7x's 64 MiB VMEM).  Keeps >=2
    grid steps when possible so the 'parallel' grid axis can shard across v7x's
    2 TensorCores.
    """
    target_bytes = 2 * 1024 * 1024
    rb = max(8, (target_bytes // max(1, out_cols * itemsize)) // 8 * 8)
    if total_rows > 8:
        half = ((total_rows + 1) // 2 + 7) // 8 * 8
        rb = min(rb, half)
    rb = min(rb, total_rows)
    # (8,128) rule: second-minor block dim must be a multiple of 8 or the full dim.
    if rb != total_rows and rb % 8 != 0:
        rb = max(8, (rb // 8) * 8)
    return rb


def upsample_nearest(x, scale_factor):
    """x: (N, C, H, W) float array; integer scale_factor; mode='nearest'."""
    s = int(scale_factor)
    assert s >= 1 and float(scale_factor) == s, "integer scale factors only"
    # TODO(synk): non-integer scale factors (allowed by F.interpolate) not supported.
    N, C, H, W = x.shape
    Hs, Ws = H * s, W * s
    if s == 1:
        return x

    rows = N * C * H
    out_cols = s * s * W  # == s * Ws

    # Free (contiguous, metadata-only) reshape to the 2-D lane-dense view.
    x2 = x.reshape(rows, W)

    # One-hot selection matrix: M[u, k] = 1 iff u == (k % Ws) // s.
    # Built in x.dtype (0/1 is exact in f32 and bf16), so bf16 inputs take the MXU's
    # native bf16 path; each output element selects exactly one input element, so the
    # result is bit-exact nearest-neighbor replication.
    k = jnp.arange(out_cols)
    src = (k % Ws) // s
    M = (jnp.arange(W)[:, None] == src[None, :]).astype(x.dtype)

    itemsize = jnp.dtype(x.dtype).itemsize
    rb = _choose_block_rows(rows, out_cols, itemsize)
    grid = (pl.cdiv(rows, rb),)

    grid_spec = pltpu.PrefetchScalarGridSpec(
        num_scalar_prefetch=0,
        grid=grid,
        in_specs=[
            pl.BlockSpec((W, out_cols), lambda i: (0, 0)),  # M: resident across steps
            pl.BlockSpec((rb, W), lambda i: (i, 0)),        # input row block
        ],
        out_specs=pl.BlockSpec((rb, out_cols), lambda i: (i, 0)),
    )

    out2 = pl.pallas_call(
        _upsample_kernel,
        out_shape=jax.ShapeDtypeStruct((rows, out_cols), x.dtype),
        grid_spec=grid_spec,
        compiler_params=pltpu.CompilerParams(
            dimension_semantics=("parallel",),
            vmem_limit_bytes=32 * 1024 * 1024,
        ),
        cost_estimate=pl.CostEstimate(
            flops=2 * rows * W * out_cols,
            transcendentals=0,
            bytes_accessed=(rows * W + rows * out_cols + W * out_cols) * itemsize,
        ),
    )(M, x2)

    # Free reshape back to NCHW.
    return out2.reshape(N, C, Hs, Ws)


class Upsample:
    """Mirror of the PyTorch module (mode='nearest')."""

    def __init__(self, scale_factor, mode="nearest"):
        assert mode == "nearest", "only mode='nearest' is implemented"
        self.scale_factor = scale_factor
        self.mode = mode

    def __call__(self, x):
        return upsample_nearest(x, self.scale_factor)


if __name__ == "__main__":
    key = jax.random.PRNGKey(0)

    # Primary check: WGAN-GP uses Upsample(scale_factor=2) on NCHW feature maps.
    N, C, H, W = 2, 4, 16, 16
    scale = 2
    x = jax.random.normal(key, (N, C, H, W), dtype=jnp.float32)

    out = jax.block_until_ready(Upsample(scale)(x))
    ref = jnp.repeat(jnp.repeat(x, scale, axis=2), scale, axis=3)
    assert out.shape == (N, C, H * scale, W * scale)
    assert out.dtype == x.dtype
    assert jnp.array_equal(out, ref)

    # Secondary check: different scale factor + ragged row blocking.
    x3 = jax.random.normal(jax.random.PRNGKey(1), (1, 3, 8, 8), dtype=jnp.float32)
    out3 = jax.block_until_ready(upsample_nearest(x3, 3))
    ref3 = jnp.repeat(jnp.repeat(x3, 3, axis=2), 3, axis=3)
    assert out3.shape == (1, 3, 24, 24)
    assert jnp.array_equal(out3, ref3)

    print("KERNEL_OK")
</pallas_src>

<mosaic_0001>
module attributes {stable_mosaic.version = 11 : i64} {
  func.func @_upsample_kernel(%arg0: i32, %arg1: memref<16x64xf32, #tpu.memory_space<vmem>>, %arg2: memref<64x16xf32, #tpu.memory_space<vmem>>, %arg3: memref<64x64xf32, #tpu.memory_space<vmem>>) attributes {dimension_semantics = [#tpu.dimension_semantics<parallel>], iteration_bounds = array<i64: 2>, scalar_prefetch = 0 : i64, scratch_operands = 0 : i64, tpu.core_type = #tpu.core_type<tc>, window_params = [{pipeline_mode = #tpu.pipeline_mode<synchronous>, transform_indices = @transform_0, window_bounds = array<i64: 16, 64>}, {transform_indices = @transform_1, window_bounds = array<i64: 64, 16>}, {transform_indices = @transform_2, window_bounds = array<i64: 64, 64>}]} {
    %c0 = arith.constant 0 : index
    %c0_0 = arith.constant 0 : index
    %0 = vector.load %arg2[%c0, %c0_0] : memref<64x16xf32, #tpu.memory_space<vmem>>, vector<64x16xf32>
    %c0_1 = arith.constant 0 : index
    %c0_2 = arith.constant 0 : index
    %1 = vector.load %arg1[%c0_1, %c0_2] : memref<16x64xf32, #tpu.memory_space<vmem>>, vector<16x64xf32>
    %cst = arith.constant dense<0.000000e+00> : vector<64x64xf32>
    %2 = tpu.matmul %0, %1, %cst {dimension_numbers = #tpu.dot_dimension_numbers<[1], [0], [0], [1], [0, 0, 1, 1], [], []>} : vector<64x16xf32>, vector<16x64xf32>, vector<64x64xf32> -> vector<64x64xf32>
    %c0_3 = arith.constant 0 : index
    %c0_4 = arith.constant 0 : index
    %3 = vector.load %arg3[%c0_3, %c0_4] : memref<64x64xf32, #tpu.memory_space<vmem>>, vector<64x64xf32>
    tpu.vector_store %arg3[%c0_3, %c0_4], %2 {strides = array<i32>} : memref<64x64xf32, #tpu.memory_space<vmem>>, vector<64x64xf32>,
    return
  }
  func.func @transform_0(%arg0: i32) -> (i32, i32) {
    %c0_i32 = arith.constant 0 : i32
    %c0_i32_0 = arith.constant 0 : i32
    %c0_i32_1 = arith.constant 0 : i32
    return %c0_i32, %c0_i32_0 : i32, i32
  }
  func.func @transform_1(%arg0: i32) -> (i32, i32) {
    %c0_i32 = arith.constant 0 : i32
    %c0_i32_0 = arith.constant 0 : i32
    return %arg0, %c0_i32 : i32, i32
  }
  func.func @transform_2(%arg0: i32) -> (i32, i32) {
    %c0_i32 = arith.constant 0 : i32
    %c0_i32_0 = arith.constant 0 : i32
    return %arg0, %c0_i32 : i32, i32
  }
}

</mosaic_0001>

<llo_original>
// kernel: tpu_custom_call.1
$region0: #{tpu_custom_call.1}
  #allocation0 [shape = 'u32[]', space=smem, size = 0x4, offset = 0x4, fixed_abs, tag = 'smem constant byte address 0x4 - core index']
  #allocation1 [shape = 'u32[144,128]{1,0:T(1,128)}', space=vmem, size = 0x12000, scoped, tag = 'internal scratch']
  %s0 = inlined_call_operand.vmem [shape: f32[16,64], index: 0, kind: input, shape index: {}]
  %s1 = inlined_call_operand.vmem [shape: f32[128,16], index: 1, kind: input, shape index: {}]
  %s2 = inlined_call_operand.vmem [shape: f32[128,64], index: 2, kind: output, shape index: {}]
  %s3 = sld [smem:[#allocation0]]
  $region41: #{tpu_custom_call.1} parent=0
    _
  %s5 = ssub.s32 1, %s3
  %s6 = scalar_select 0, %s5, %s3
  loop: start=0, step=1, limit=4
  $region2: #{tpu_custom_call.1} parent=0 // loop_pre_header
    _
  $region3: #{tpu_custom_call.1} parent=0 // loop_header
    %s8 = sphi 0, %s12
    %p9 = scmp.ge.s32.totalorder %s8, 4
    %s16 = sphi 0, %s16
    %s18 = sphi 0, %s16
    %s19 = sphi 0, %s18
    %s33 = sphi 0, %s19
    %s39 = sphi 0, %s41
    %s42 = sphi 0, %s39
    %s43 = sphi 0, %s42
    %s59 = sphi 0, %s43
    %s65 = sphi 0, %s67
    %s68 = sphi 0, %s65
    %s69 = sphi 0, %s68
    %s85 = sphi 0, %s69
  $region4: #{tpu_custom_call.1} parent=0 // loop_header_branch
    %11 = sbr.rel (%p9) target = $region8
  $region5: #{tpu_custom_call.1} parent=0 // loop_body
    %s13 = ssub.s32 %s8, 1
    %s14 = ssub.s32 %s8, 2
    %s15 = sadd.s32 %s8, 1
    %s17 = sadd.s32 %s16, 1
    %p20 = scmp.eq.s32.totalorder %s8, 1
    %p21 = scmp.ne.s32.totalorder %s16, %s18
    %p22 = scmp.eq.s32.totalorder %s8, 0
    %p23 = por %p21, %p22
    %p24 = scmp.ne.s32.totalorder %s16, %s18
    %p25 = scmp.eq.s32.totalorder %s13, 1
    %p26 = por %p24, %p25
    %p27 = scmp.ne.s32.totalorder %s18, %s19
    %p28 = scmp.eq.s32.totalorder %s13, 0
    %p29 = por %p27, %p28
    %p30 = scmp.ne.s32.totalorder %s18, %s19
    %p31 = scmp.eq.s32.totalorder %s14, 1
    %p32 = por %p30, %p31
    %p34 = scmp.ne.s32.totalorder %s19, %s33
    %p35 = scmp.eq.s32.totalorder %s14, 0
    %p36 = por %p34, %p35
    %s37 = ssub.s32 %s8, %s15
    %p38 = scmp.eq.s32.totalorder %s37, 0
    %s40 = sadd.s32 %s39, 1
    %s41 = scalar_select %p38, %s39, %s40
    %p44 = pneg %p38
    %p45 = scmp.eq.s32.totalorder %s8, 1
    %p46 = por %p44, %p45
    %p47 = scmp.ne.s32.totalorder %s39, %s42
    %p48 = scmp.eq.s32.totalorder %s8, 0
    %p49 = por %p47, %p48
    %p50 = scmp.ne.s32.totalorder %s39, %s42
    %p51 = scmp.eq.s32.totalorder %s13, 1
    %p52 = por %p50, %p51
    %p53 = scmp.ne.s32.totalorder %s42, %s43
    %p54 = scmp.eq.s32.totalorder %s13, 0
    %p55 = por %p53, %p54
    %p56 = scmp.ne.s32.totalorder %s42, %s43
    %p57 = scmp.eq.s32.totalorder %s14, 1
    %p58 = por %p56, %p57
    %p60 = scmp.ne.s32.totalorder %s43, %s59
    %p61 = scmp.eq.s32.totalorder %s14, 0
    %p62 = por %p60, %p61
    %s63 = ssub.s32 %s8, %s15
    %p64 = scmp.eq.s32.totalorder %s63, 0
    %s66 = sadd.s32 %s65, 1
    %s67 = scalar_select %p64, %s65, %s66
    %p70 = pneg %p64
    %p71 = scmp.eq.s32.totalorder %s8, 1
    %p72 = por %p70, %p71
    %p73 = scmp.ne.s32.totalorder %s65, %s68
    %p74 = scmp.eq.s32.totalorder %s8, 0
    %p75 = por %p73, %p74
    %p76 = scmp.ne.s32.totalorder %s65, %s68
    %p77 = scmp.eq.s32.totalorder %s13, 1
    %p78 = por %p76, %p77
    %p79 = scmp.ne.s32.totalorder %s68, %s69
    %p80 = scmp.eq.s32.totalorder %s13, 0
    %p81 = por %p79, %p80
    %p82 = scmp.ne.s32.totalorder %s68, %s69
    %p83 = scmp.eq.s32.totalorder %s14, 1
    %p84 = por %p82, %p83
    %p86 = scmp.ne.s32.totalorder %s69, %s85
    %p87 = scmp.eq.s32.totalorder %s14, 0
    %p88 = por %p86, %p87
    %p89 = scmp.le.s32.totalorder 1, %s8
    %p90 = scmp.lt.s32.totalorder %s8, 3
    %p91 = pnand %p89, %p90
    %p92 = pneg %p91
    // Predicated region
    $region9: #{tpu_custom_call.1} parent=5 // pred_check
      _
    $region10: #{tpu_custom_call.1} parent=5 // pred_check_branch
      %94 = sbr.rel (%p91) target = $region12
    $region11: #{tpu_custom_call.1} parent=5 // pred_region
      %s95 = ssub.s32 %s8, 1
      // Predicated region
      $region13: #{tpu_custom_call.1} parent=11 // pred_check
        %p96 = pneg %p29
      $region14: #{tpu_custom_call.1} parent=11 // pred_check_branch
        %98 = sbr.rel (%p96) target = $region16
      $region15: #{tpu_custom_call.1} parent=11 // pred_region
        _
      $region16: #{tpu_custom_call.1} parent=11 // pred_fallthru
        _
    $region12: #{tpu_custom_call.1} parent=5 // pred_fallthru
      _
    %p99 = scmp.lt.s32.totalorder %s8, 2
    // Predicated region
    $region17: #{tpu_custom_call.1} parent=5 // pred_check
      %p100 = pneg %p99
    $region18: #{tpu_custom_call.1} parent=5 // pred_check_branch
      %102 = sbr.rel (%p100) target = $region20
    $region19: #{tpu_custom_call.1} parent=5 // pred_region
      // Predicated region
      $region21: #{tpu_custom_call.1} parent=19 // pred_check
        %p103 = pneg %p49
      $region22: #{tpu_custom_call.1} parent=19 // pred_check_branch
        %105 = sbr.rel (%p103) target = $region24
      $region23: #{tpu_custom_call.1} parent=19 // pred_region
        %s106 = smul.u32 8, %s8
        %p107 = scmp.lt.s32.totalorder %s106, 15
        %s108 = scalar_select %p107, %s106, 15
        %s109 = smul.addr %s108, 8
        %s110 = scalar_lea.vmem %s1, %s109
        %s111 = smul.u32 8, %s8
      $region24: #{tpu_custom_call.1} parent=19 // pred_fallthru
        _
    $region20: #{tpu_custom_call.1} parent=5 // pred_fallthru
      _
    %p112 = scmp.le.s32.totalorder 1, %s8
    %p113 = scmp.lt.s32.totalorder %s8, 3
    %p114 = pnand %p112, %p113
    %p115 = pneg %p114
    // Predicated region
    $region25: #{tpu_custom_call.1} parent=5 // pred_check
      _
    $region26: #{tpu_custom_call.1} parent=5 // pred_check_branch
      %117 = sbr.rel (%p114) target = $region28
    $region27: #{tpu_custom_call.1} parent=5 // pred_region
      %s118 = ssub.s32 %s8, 1
      %p119 = pneg %p29
      %p120 = pneg %p26
      %s121 = smul.u32 8, %s13
      %p122 = scmp.lt.s32.totalorder %s121, 15
      %s123 = scalar_select %p122, %s121, 15
      %s124 = smul.addr %s123, 8
      %s125 = scalar_lea.vmem %s1, %s124
      %p126 = pneg %p55
      %p127 = pneg %p52
      %p128 = pneg %p81
      %p129 = pneg %p78
      %s130 = smul.u32 8, %s13
      %p131 = scmp.lt.s32.totalorder %s130, 15
      %s132 = scalar_select %p131, %s130, 15
      %s133 = smul.addr %s132, 8
      %s134 = scalar_lea.vmem %s2, %s133
      %s135 = smul.u32 8, %s13
      %p136 = scmp.lt.s32.totalorder %s135, 15
      %s137 = scalar_select %p136, %s135, 15
      %s138 = smul.addr %s137, 8
      %s139 = scalar_lea.vmem %s1, %s138
      %s140 = smul.u32 8, %s13
      %s141 = smul.u32 8, %s13
      %p142 = scmp.lt.s32.totalorder %s141, 15
      %s143 = scalar_select %p142, %s141, 15
      %s144 = smul.addr %s143, 8
      %s145 = scalar_lea.vmem %s2, %s144
      %s146 = smul.u32 8, %s13
      %v147 = vld [vmem:[%s139] sm:$0xff]
      %v148 = vld [vmem:[%s139 + $0x8] sm:$0xff]
      %v149 = vld [vmem:[%s139 + $0x10] sm:$0xff]
      %v150 = vld [vmem:[%s139 + $0x18] sm:$0xff]
      %v151 = vld [vmem:[%s139 + $0x20] sm:$0xff]
      %v152 = vld [vmem:[%s139 + $0x28] sm:$0xff]
      %v153 = vld [vmem:[%s139 + $0x30] sm:$0xff]
      %v154 = vld [vmem:[%s139 + $0x38] sm:$0xff]
      %v155 = vld [vmem:[%s0] sm:$0xff]
      %v156 = vld [vmem:[%s0 + $0x8] sm:$0xff]
      %vm157 = vcmask 130048
      %v159 = vsel %vm157, %v147, 0
      %v162 = vsel %vm157, %v148, 0
      %v165 = vsel %vm157, %v149, 0
      %v168 = vsel %vm157, %v150, 0
      %v171 = vsel %vm157, %v151, 0
      %v174 = vsel %vm157, %v152, 0
      %v177 = vsel %vm157, %v153, 0
      %v180 = vsel %vm157, %v154, 0
      %182 = vmatprep.subr.mxu0 0.0
      %183 = vmatpush1.msra.mxu0 0.0
      %184 = vmatprep.subr.mxu0 0.0
      %185 = vmatpush1.msra.mxu0 0.0
      %186 = vmatprep.subr.mxu0 0.0
      %187 = vmatpush1.msra.mxu0 0.0
      %188 = vmatprep.subr.mxu0 0.0
      %189 = vmatpush1.msra.mxu0 0.0
      %190 = vmatprep.subr.mxu0 0.0
      %191 = vmatpush1.msra.mxu0 0.0
      %192 = vmatprep.subr.mxu0 0.0
      %193 = vmatpush1.msra.mxu0 0.0
      %194 = vmatprep.subr.mxu0 0.0
      %195 = vmatpush1.msra.mxu0 0.0
      %196 = vmatprep.subr.mxu0 0.0
      %197 = vmatpush1.msra.mxu0 0.0
      %198 = vmatprep.subr.mxu0 0.0
      %199 = vmatpush1.msra.mxu0 0.0
      %200 = vmatprep.subr.mxu0 0.0
      %201 = vmatpush1.msra.mxu0 0.0
      %202 = vmatprep.subr.mxu0 0.0
      %203 = vmatpush1.msra.mxu0 0.0
      %204 = vmatprep.subr.mxu0 0.0
      %205 = vmatpush1.msra.mxu0 0.0
      %206 = vmatprep.subr.mxu0 0.0
      %207 = vmatpush1.msra.mxu0 0.0
      %208 = vmatprep.subr.mxu0 0.0
      %209 = vmatpush1.msra.mxu0 0.0
      %210 = vmatprep.subr.mxu0 0.0
      %211 = vmatpush1.msra.mxu0 %v156
      %212 = vmatprep.subr.mxu0 0.0
      %213 = vmatpush1.msra.mxu0 %v155
      %214 = vmatprep.subr.mxu0 0.0
      %215 = vmatpush2.msra.mxu0 0.0
      %216 = vmatprep.subr.mxu0 0.0
      %217 = vmatpush2.msra.mxu0 0.0
      %218 = vmatprep.subr.mxu0 0.0
      %219 = vmatpush2.msra.mxu0 0.0
      %220 = vmatprep.subr.mxu0 0.0
      %221 = vmatpush2.msra.mxu0 0.0
      %222 = vmatprep.subr.mxu0 0.0
      %223 = vmatpush2.msra.mxu0 0.0
      %224 = vmatprep.subr.mxu0 0.0
      %225 = vmatpush2.msra.mxu0 0.0
      %226 = vmatprep.subr.mxu0 0.0
      %227 = vmatpush2.msra.mxu0 0.0
      %228 = vmatprep.subr.mxu0 0.0
      %229 = vmatpush2.msra.mxu0 0.0
      %230 = vmatprep.subr.mxu0 0.0
      %231 = vmatpush2.msra.mxu0 0.0
      %232 = vmatprep.subr.mxu0 0.0
      %233 = vmatpush2.msra.mxu0 0.0
      %234 = vmatprep.subr.mxu0 0.0
      %235 = vmatpush2.msra.mxu0 0.0
      %236 = vmatprep.subr.mxu0 0.0
      %237 = vmatpush2.msra.mxu0 0.0
      %238 = vmatprep.subr.mxu0 0.0
      %239 = vmatpush2.msra.mxu0 0.0
      %240 = vmatprep.subr.mxu0 0.0
      %241 = vmatpush2.msra.mxu0 0.0
      %242 = vmatprep.subr.mxu0 0.0
      %243 = vmatpush2.msra.mxu0 0.0
      %244 = vmatprep.subr.mxu0 0.0
      %245 = vmatpush2.msra.mxu0 0.0
      %246 = vmatprep.mubr.f32.mxu0 0.0
      %247 = vmatmul.mubr.f32.gmra.mxu0 %v159
      %v248 = vpop.f32.mrf.mxu0
      %v249 = vadd.f32 0.0, %v248
      %v250 = vpop.f32.mrf.mxu0
      %251 = vmatprep.mubr.f32.mxu0 0.0
      %252 = vmatmul.mubr.f32.gmra.mxu0 %v162
      %v253 = vpop.f32.mrf.mxu0
      %v254 = vadd.f32 0.0, %v253
      %v255 = vpop.f32.mrf.mxu0
      %256 = vmatprep.mubr.f32.mxu0 0.0
      %257 = vmatmul.mubr.f32.gmra.mxu0 %v165
      %v258 = vpop.f32.mrf.mxu0
      %v259 = vadd.f32 0.0, %v258
      %v260 = vpop.f32.mrf.mxu0
      %261 = vmatprep.mubr.f32.mxu0 0.0
      %262 = vmatmul.mubr.f32.gmra.mxu0 %v168
      %v263 = vpop.f32.mrf.mxu0
      %v264 = vadd.f32 0.0, %v263
      %v265 = vpop.f32.mrf.mxu0
      %266 = vmatprep.mubr.f32.mxu0 0.0
      %267 = vmatmul.mubr.f32.gmra.mxu0 %v171
      %v268 = vpop.f32.mrf.mxu0
      %v269 = vadd.f32 0.0, %v268
      %v270 = vpop.f32.mrf.mxu0
      %271 = vmatprep.mubr.f32.mxu0 0.0
      %272 = vmatmul.mubr.f32.gmra.mxu0 %v174
      %v273 = vpop.f32.mrf.mxu0
      %v274 = vadd.f32 0.0, %v273
      %v275 = vpop.f32.mrf.mxu0
      %276 = vmatprep.mubr.f32.mxu0 0.0
      %277 = vmatmul.mubr.f32.gmra.mxu0 %v177
      %v278 = vpop.f32.mrf.mxu0
      %v279 = vadd.f32 0.0, %v278
      %v280 = vpop.f32.mrf.mxu0
      %281 = vmatprep.mubr.f32.mxu0 0.0
      %282 = vmatmul.mubr.f32.gmra.mxu0 %v180
      %v283 = vpop.f32.mrf.mxu0
      %v284 = vadd.f32 0.0, %v283
      %v285 = vpop.f32.mrf.mxu0
      %286 = vdwg.mxu0
      %vm287 = vcmask 523264
      %288 = vst.msk [vmem:[%s145] sm:$0xff] %vm287, %v249
      %289 = vst.msk [vmem:[%s145 + $0x8] sm:$0xff] %vm287, %v254
      %290 = vst.msk [vmem:[%s145 + $0x10] sm:$0xff] %vm287, %v259
      %291 = vst.msk [vmem:[%s145 + $0x18] sm:$0xff] %vm287, %v264
      %292 = vst.msk [vmem:[%s145 + $0x20] sm:$0xff] %vm287, %v269
      %293 = vst.msk [vmem:[%s145 + $0x28] sm:$0xff] %vm287, %v274
      %294 = vst.msk [vmem:[%s145 + $0x30] sm:$0xff] %vm287, %v279
      %295 = vst.msk [vmem:[%s145 + $0x38] sm:$0xff] %vm287, %v284
      %s296 = smul.u32 8, %s13
      %p297 = scmp.lt.s32.totalorder %s296, 15
      %s298 = scalar_select %p297, %s296, 15
      %s299 = smul.addr %s298, 8
      %s300 = scalar_lea.vmem %s2, %s299
      // Predicated region
      $region29: #{tpu_custom_call.1} parent=27 // pred_check
        %p301 = pneg %p78
      $region30: #{tpu_custom_call.1} parent=27 // pred_check_branch
        %303 = sbr.rel (%p301) target = $region32
      $region31: #{tpu_custom_call.1} parent=27 // pred_region
        %s304 = smul.u32 8, %s13
      $region32: #{tpu_custom_call.1} parent=27 // pred_fallthru
        _
    $region28: #{tpu_custom_call.1} parent=5 // pred_fallthru
      _
    %p305 = scmp.le.s32.totalorder 2, %s8
    // Predicated region
    $region33: #{tpu_custom_call.1} parent=5 // pred_check
      %p306 = pneg %p305
    $region34: #{tpu_custom_call.1} parent=5 // pred_check_branch
      %308 = sbr.rel (%p306) target = $region36
    $region35: #{tpu_custom_call.1} parent=5 // pred_region
      %s309 = ssub.s32 %s8, 2
      // Predicated region
      $region37: #{tpu_custom_call.1} parent=35 // pred_check
        %p310 = pneg %p84
      $region38: #{tpu_custom_call.1} parent=35 // pred_check_branch
        %312 = sbr.rel (%p310) target = $region40
      $region39: #{tpu_custom_call.1} parent=35 // pred_region
        %s313 = smul.u32 8, %s14
        %p314 = scmp.lt.s32.totalorder %s313, 15
        %s315 = scalar_select %p314, %s313, 15
        %s316 = smul.addr %s315, 8
        %s317 = scalar_lea.vmem %s2, %s316
      $region40: #{tpu_custom_call.1} parent=35 // pred_fallthru
        _
    $region36: #{tpu_custom_call.1} parent=5 // pred_fallthru
      _
  $region6: #{tpu_custom_call.1} parent=0 // loop_footer
    %s12 = sadd.s32 1, %s8
  $region7: #{tpu_custom_call.1} parent=0 // loop_footer_branch
    %7 = sbr.rel target = $region3
  $region8: #{tpu_custom_call.1} parent=0 // loop_exit
    _

</llo_original>
